<compile_context>
chip_gen: v5e
topology: v5e:2x2
jax: 0.10.0
libtpu: 0.0.40
codegen_flags: <defaults>
</compile_context>

<pallas_src>
import jax
import jax.numpy as jnp
from jax.experimental import pallas as pl
from jax.experimental.pallas import tpu as pltpu


def _round_up(x: int, m: int) -> int:
    return ((x + m - 1) // m) * m


def _tpu_vmem_capacity_bytes() -> int:
    """Per-TensorCore VMEM capacity; conservative 64 MiB (v7x) fallback."""
    try:
        info_fn = getattr(pltpu, "get_tpu_info", None)
        if info_fn is not None:
            cap = int(getattr(info_fn(), "vmem_capacity_bytes", 0) or 0)
            if cap > 0:
                return cap
    except Exception:
        pass
    return 64 << 20


# --------------------------------------------------------------------------- #
# Kernels
# --------------------------------------------------------------------------- #

def _se_single_pass_kernel(len_ref, x_ref, w1_ref, b1_ref, w2_ref, b2_ref, o_ref):
    """One (NB, D, T) tile per grid step: squeeze + excite + scale, single HBM pass.

    len_ref : SMEM (B,) int32    -- scalar-prefetched input lengths
    x_ref   : VMEM (NB, D, T)    -- input tile (T == full sequence length)
    w1_ref  : VMEM (D, D//8)     -- Linear1 weight, (in, out)
    b1_ref  : VMEM (1, D//8)
    w2_ref  : VMEM (D//8, D)     -- Linear2 weight, (in, out)
    b2_ref  : VMEM (1, D)
    o_ref   : VMEM (NB, D, T)
    """
    nb, d, _ = x_ref.shape
    base = pl.program_id(0) * nb

    # Squeeze: sum over time (lane axis), divide by the true per-row length.
    pooled = jnp.sum(x_ref[...].astype(jnp.float32), axis=2)          # (NB, D)
    if nb == 1:
        pooled = pooled * (1.0 / len_ref[base].astype(jnp.float32))
    else:
        # Per-row 1/length plane via cheap VPU selects (hidden under DMA).
        row_ids = jax.lax.broadcasted_iota(jnp.int32, (nb, d), 0)
        inv = jnp.zeros((nb, d), jnp.float32)
        for j in range(nb):
            inv = jnp.where(row_ids == j,
                            1.0 / len_ref[base + j].astype(jnp.float32), inv)
        pooled = pooled * inv

    # Excitation: Linear -> Swish -> Linear -> sigmoid (tiny matmuls, M = NB).
    h = jnp.dot(pooled, w1_ref[...], preferred_element_type=jnp.float32) + b1_ref[...]
    h = h * jax.nn.sigmoid(h)
    g = jnp.dot(h, w2_ref[...], preferred_element_type=jnp.float32) + b2_ref[...]
    gate = jax.nn.sigmoid(g).astype(x_ref.dtype)                       # (NB, D)

    # Scale sweep in the input dtype (bf16 stays bf16 on v6e/v7x); re-read the
    # ref instead of keeping a multi-MiB value live across the excitation math.
    o_ref[...] = (x_ref[...] * gate[:, :, None]).astype(o_ref.dtype)


def _make_gate_kernel(t_total: int):
    """Pass 1 of the long-sequence path: pooled sum over T tiles -> SE gate.

    Grid: (B, T_tiles), T axis "arbitrary" (reduction, output resident).
    The ragged T tail is masked in-kernel (no wrapper padding).
    """
    def kernel(len_ref, x_ref, w1_ref, b1_ref, w2_ref, b2_ref, gate_ref, acc_ref):
        b = pl.program_id(0)
        t = pl.program_id(1)
        tt = x_ref.shape[2]

        @pl.when(t == 0)
        def _():
            acc_ref[...] = jnp.zeros_like(acc_ref)

        x = x_ref[...].astype(jnp.float32)
        if t_total % tt != 0:
            col = jax.lax.broadcasted_iota(jnp.int32, x.shape, 2) + t * tt
            x = jnp.where(col < t_total, x, 0.0)
        acc_ref[...] += jnp.sum(x, axis=2)                              # (1, D)

        @pl.when(t == pl.num_programs(1) - 1)
        def _():
            pooled = acc_ref[...] * (1.0 / len_ref[b].astype(jnp.float32))
            h = jnp.dot(pooled, w1_ref[...], preferred_element_type=jnp.float32) + b1_ref[...]
            h = h * jax.nn.sigmoid(h)
            g = jnp.dot(h, w2_ref[...], preferred_element_type=jnp.float32) + b2_ref[...]
            gate_ref[...] = jax.nn.sigmoid(g)[:, None, :]               # (1, 1, D)

    return kernel


def _se_apply_kernel(x_ref, gate_ref, o_ref):
    """Pass 2 of the long-sequence path: out = gate * x, tile by tile."""
    gate = gate_ref[...].reshape(1, gate_ref.shape[2]).astype(x_ref.dtype)   # (1, D)
    o_ref[...] = (x_ref[...] * gate[:, :, None]).astype(o_ref.dtype)


# --------------------------------------------------------------------------- #
# Wrapper
# --------------------------------------------------------------------------- #

def contextnet_se_module(inputs, input_lengths, w1_t, b1, w2_t, b2,
                         *, block_budget_bytes=None):
    """inputs: (B, D, T); input_lengths: (B,) int.

    w1_t: (D, D//8), b1: (1, D//8), w2_t: (D//8, D), b2: (1, D)
    (weights pre-transposed to (in, out) so the kernel does plain x @ W).
    """
    B, D, T = inputs.shape
    assert D % 8 == 0, "Dimension should be divisible by 8."
    dtype = inputs.dtype
    itemsize = jnp.dtype(dtype).itemsize
    lengths = input_lengths.astype(jnp.int32)
    w_bytes = int(w1_t.size + b1.size + w2_t.size + b2.size) * 4

    # Generation-aware VMEM budgets.
    vmem_cap = _tpu_vmem_capacity_bytes()                 # 64 MiB v7x, 128 MiB v5e/v6e
    vmem_ceiling = max(vmem_cap - (6 << 20), 32 << 20)    # headroom for compiler scratch
    if block_budget_bytes is None:
        # ~40 MiB on v7x, ~104 MiB on v5e/v6e for the double-buffered in+out blocks.
        block_budget_bytes = max(vmem_cap - (24 << 20), vmem_cap // 2)

    # ---- single-pass batch-block selection (NB must divide B: no pad/slice) ----
    # footprint = 2 in-buffers + 2 out-buffers = 4 * NB*D*T*itemsize.
    fitting = [c for c in (8, 4, 2, 1)
               if B % c == 0 and 4 * c * D * T * itemsize <= block_budget_bytes]
    nb = 0
    for cand in fitting:                       # largest NB still giving >=4 even steps
        steps = B // cand
        if steps >= 4 and steps % 2 == 0:      # >=2 steps per v7x TC, balanced
            nb = cand
            break
    if nb == 0 and fitting:
        nb = fitting[-1]                       # smallest fitting divisor -> most steps

    if nb > 0:
        # -------- single HBM pass: x read once, written once, no padding --------
        blk_bytes = nb * D * T * itemsize
        vmem_limit = min(max(4 * blk_bytes + 2 * w_bytes + (8 << 20), 32 << 20),
                         vmem_ceiling)
        grid_spec = pltpu.PrefetchScalarGridSpec(
            num_scalar_prefetch=1,
            grid=(B // nb,),
            in_specs=[
                pl.BlockSpec((nb, D, T), lambda i, lens: (i, 0, 0)),      # inputs
                pl.BlockSpec((D, D // 8), lambda i, lens: (0, 0)),        # w1_t
                pl.BlockSpec((1, D // 8), lambda i, lens: (0, 0)),        # b1
                pl.BlockSpec((D // 8, D), lambda i, lens: (0, 0)),        # w2_t
                pl.BlockSpec((1, D), lambda i, lens: (0, 0)),             # b2
            ],
            out_specs=pl.BlockSpec((nb, D, T), lambda i, lens: (i, 0, 0)),
        )
        return pl.pallas_call(
            _se_single_pass_kernel,
            out_shape=jax.ShapeDtypeStruct((B, D, T), dtype),
            grid_spec=grid_spec,
            compiler_params=pltpu.CompilerParams(
                dimension_semantics=("parallel",),
                vmem_limit_bytes=vmem_limit,
            ),
        )(lengths, inputs, w1_t, b1, w2_t, b2)

    # -------- long sequences: two passes over a T-tiled grid (no padding) --------
    # Pass 1 has no large output block -> ~2x the pass-2 tile.
    tt1 = max(128, (block_budget_bytes // (2 * D * itemsize)) // 128 * 128)
    tt2 = max(128, (block_budget_bytes // (4 * D * itemsize)) // 128 * 128)
    tt1 = T if tt1 >= T else tt1
    tt2 = T if tt2 >= T else tt2
    n_t1 = pl.cdiv(T, tt1)
    n_t2 = pl.cdiv(T, tt2)

    # Pass 1: pooled mean + excitation -> gate (B, 1, D)
    vmem_limit1 = min(max(2 * D * tt1 * itemsize + 2 * w_bytes + (8 << 20), 32 << 20),
                      vmem_ceiling)
    gate = pl.pallas_call(
        _make_gate_kernel(T),
        out_shape=jax.ShapeDtypeStruct((B, 1, D), jnp.float32),
        grid_spec=pltpu.PrefetchScalarGridSpec(
            num_scalar_prefetch=1,
            grid=(B, n_t1),
            in_specs=[
                pl.BlockSpec((1, D, tt1), lambda b, t, lens: (b, 0, t)),
                pl.BlockSpec((D, D // 8), lambda b, t, lens: (0, 0)),
                pl.BlockSpec((1, D // 8), lambda b, t, lens: (0, 0)),
                pl.BlockSpec((D // 8, D), lambda b, t, lens: (0, 0)),
                pl.BlockSpec((1, D), lambda b, t, lens: (0, 0)),
            ],
            out_specs=pl.BlockSpec((1, 1, D), lambda b, t, lens: (b, 0, 0)),
            scratch_shapes=[pltpu.VMEM((1, D), jnp.float32)],
        ),
        compiler_params=pltpu.CompilerParams(
            dimension_semantics=("parallel", "arbitrary"),
            vmem_limit_bytes=vmem_limit1,
        ),
    )(lengths, inputs, w1_t, b1, w2_t, b2)

    # Pass 2: scale x by the gate, tile by tile (both axes parallel).
    vmem_limit2 = min(max(4 * D * tt2 * itemsize + (8 << 20), 32 << 20), vmem_ceiling)
    out = pl.pallas_call(
        _se_apply_kernel,
        out_shape=jax.ShapeDtypeStruct((B, D, T), dtype),
        grid_spec=pltpu.PrefetchScalarGridSpec(
            num_scalar_prefetch=0,
            grid=(B, n_t2),
            in_specs=[
                pl.BlockSpec((1, D, tt2), lambda b, t: (b, 0, t)),
                pl.BlockSpec((1, 1, D), lambda b, t: (b, 0, 0)),
            ],
            out_specs=pl.BlockSpec((1, D, tt2), lambda b, t: (b, 0, t)),
        ),
        compiler_params=pltpu.CompilerParams(
            dimension_semantics=("parallel", "parallel"),
            vmem_limit_bytes=vmem_limit2,
        ),
    )(inputs, gate)
    return out


def reference_se_module(inputs, input_lengths, w1_t, b1, w2_t, b2):
    """Pure-JAX reference matching the PyTorch forward (f32 math)."""
    x = inputs.astype(jnp.float32)
    pooled = jnp.sum(x, axis=2) / input_lengths[:, None].astype(jnp.float32)
    h = jnp.dot(pooled, w1_t, precision=jax.lax.Precision.HIGHEST) + b1
    h = h * jax.nn.sigmoid(h)
    g = jnp.dot(h, w2_t, precision=jax.lax.Precision.HIGHEST) + b2
    return (jax.nn.sigmoid(g)[:, :, None] * x).astype(inputs.dtype)


# --------------------------------------------------------------------------- #
# Demo / self-test
# --------------------------------------------------------------------------- #

if __name__ == "__main__":
    def make_case(key, B, D, T, dtype=jnp.float32):
        ks = jax.random.split(key, 6)
        x = jax.random.normal(ks[0], (B, D, T), dtype=jnp.float32).astype(dtype)
        lens = jax.random.randint(ks[1], (B,), minval=max(1, T // 2), maxval=T + 1,
                                  dtype=jnp.int32)
        # PyTorch nn.Linear stores weight as (out, in); pass transposes to the kernel.
        s1 = 1.0 / jnp.sqrt(jnp.float32(D))
        s2 = 1.0 / jnp.sqrt(jnp.float32(D // 8))
        w1 = jax.random.uniform(ks[2], (D // 8, D), minval=-s1, maxval=s1, dtype=jnp.float32)
        b1 = jax.random.uniform(ks[3], (1, D // 8), minval=-s1, maxval=s1, dtype=jnp.float32)
        w2 = jax.random.uniform(ks[4], (D, D // 8), minval=-s2, maxval=s2, dtype=jnp.float32)
        b2 = jax.random.uniform(ks[5], (1, D), minval=-s2, maxval=s2, dtype=jnp.float32)
        return x, lens, w1.T, b1, w2.T, b2

    key = jax.random.PRNGKey(0)
    k1, k2, k3, k4 = jax.random.split(key, 4)

    # 1) Small canonical shape -> single-pass, NB=1, ragged T (masked tail store,
    #    no wrapper padding or slicing).
    args = make_case(k1, 2, 32, 16)
    out = jax.block_until_ready(contextnet_se_module(*args))
    ref = reference_se_module(*args)
    assert out.shape == ref.shape
    assert jnp.allclose(out, ref, atol=1e-4, rtol=1e-4), "mismatch (single-pass NB=1)"

    # 2) Larger batch -> NB=4 (>= 4 even grid steps), ragged T.
    args = make_case(k2, 16, 32, 100)
    out = jax.block_until_ready(contextnet_se_module(*args))
    ref = reference_se_module(*args)
    assert jnp.allclose(out, ref, atol=1e-4, rtol=1e-4), "mismatch (single-pass NB=4)"

    # 3) Tiny VMEM budget forces the two-pass T-tiled path with a ragged tail tile.
    args = make_case(k3, 3, 32, 300)
    out = jax.block_until_ready(
        contextnet_se_module(*args, block_budget_bytes=64 * 1024))
    ref = reference_se_module(*args)
    assert jnp.allclose(out, ref, atol=1e-4, rtol=1e-4), "mismatch (two-pass)"

    # 4) bf16 inputs -> native bf16 scale sweep (f32 accumulation for the pool).
    args = make_case(k4, 4, 32, 64, dtype=jnp.bfloat16)
    out = jax.block_until_ready(contextnet_se_module(*args))
    ref = reference_se_module(*args)
    assert jnp.allclose(out.astype(jnp.float32), ref.astype(jnp.float32),
                        atol=3e-2, rtol=3e-2), "mismatch (bf16)"

    print("KERNEL_OK")
</pallas_src>

<mosaic_0001>
module attributes {stable_mosaic.version = 11 : i64} {
  func.func @_se_single_pass_kernel(%arg0: i32, %arg1: memref<2xi32, #tpu.memory_space<smem>>, %arg2: memref<1x32x16xf32, #tpu.memory_space<vmem>>, %arg3: memref<32x4xf32, #tpu.memory_space<vmem>>, %arg4: memref<1x4xf32, #tpu.memory_space<vmem>>, %arg5: memref<4x32xf32, #tpu.memory_space<vmem>>, %arg6: memref<1x32xf32, #tpu.memory_space<vmem>>, %arg7: memref<1x32x16xf32, #tpu.memory_space<vmem>>) attributes {dimension_semantics = [#tpu.dimension_semantics<parallel>], iteration_bounds = array<i64: 2>, scalar_prefetch = 1 : i64, scratch_operands = 0 : i64, tpu.core_type = #tpu.core_type<tc>, window_params = [{transform_indices = @transform_0, window_bounds = array<i64: 1, 32, 16>}, {pipeline_mode = #tpu.pipeline_mode<synchronous>, transform_indices = @transform_1, window_bounds = array<i64: 32, 4>}, {pipeline_mode = #tpu.pipeline_mode<synchronous>, transform_indices = @transform_2, window_bounds = array<i64: 1, 4>}, {pipeline_mode = #tpu.pipeline_mode<synchronous>, transform_indices = @transform_3, window_bounds = array<i64: 4, 32>}, {pipeline_mode = #tpu.pipeline_mode<synchronous>, transform_indices = @transform_4, window_bounds = array<i64: 1, 32>}, {transform_indices = @transform_5, window_bounds = array<i64: 1, 32, 16>}]} {
    %c1_i32 = arith.constant 1 : i32
    %0 = arith.muli %arg0, %c1_i32 : i32
    %c0 = arith.constant 0 : index
    %c0_0 = arith.constant 0 : index
    %c0_1 = arith.constant 0 : index
    %1 = vector.load %arg2[%c0, %c0_0, %c0_1] : memref<1x32x16xf32, #tpu.memory_space<vmem>>, vector<1x32x16xf32>
    %cst = arith.constant dense<0.000000e+00> : vector<1x32xf32>
    %2 = vector.multi_reduction <add>, %1, %cst [2] : vector<1x32x16xf32> to vector<1x32xf32>
    %3 = arith.index_cast %0 : i32 to index
    %4 = memref.load %arg1[%3] : memref<2xi32, #tpu.memory_space<smem>>
    %5 = arith.sitofp %4 : i32 to f32
    %cst_2 = arith.constant 1.000000e+00 : f32
    %6 = arith.divf %cst_2, %5 : f32
    %7 = vector.broadcast %6 : f32 to vector<1x32xf32>
    %8 = arith.mulf %2, %7 : vector<1x32xf32>
    %c0_3 = arith.constant 0 : index
    %c0_4 = arith.constant 0 : index
    %9 = vector.load %arg3[%c0_3, %c0_4] : memref<32x4xf32, #tpu.memory_space<vmem>>, vector<32x4xf32>
    %cst_5 = arith.constant dense<0.000000e+00> : vector<1x4xf32>
    %10 = tpu.matmul %8, %9, %cst_5 {dimension_numbers = #tpu.dot_dimension_numbers<[1], [0], [0], [1], [0, 0, 1, 1], [], []>} : vector<1x32xf32>, vector<32x4xf32>, vector<1x4xf32> -> vector<1x4xf32>
    %c0_6 = arith.constant 0 : index
    %c0_7 = arith.constant 0 : index
    %11 = vector.load %arg4[%c0_6, %c0_7] : memref<1x4xf32, #tpu.memory_space<vmem>>, vector<1x4xf32>
    %12 = arith.addf %10, %11 : vector<1x4xf32>
    %13 = arith.negf %12 : vector<1x4xf32>
    %14 = math.exp %13 : vector<1x4xf32>
    %cst_8 = arith.constant 1.000000e+00 : f32
    %15 = vector.broadcast %cst_8 : f32 to vector<1x4xf32>
    %16 = arith.addf %15, %14 : vector<1x4xf32>
    %17 = arith.divf %15, %16 : vector<1x4xf32>
    %18 = arith.mulf %12, %17 : vector<1x4xf32>
    %c0_9 = arith.constant 0 : index
    %c0_10 = arith.constant 0 : index
    %19 = vector.load %arg5[%c0_9, %c0_10] : memref<4x32xf32, #tpu.memory_space<vmem>>, vector<4x32xf32>
    %cst_11 = arith.constant dense<0.000000e+00> : vector<1x32xf32>
    %20 = tpu.matmul %18, %19, %cst_11 {dimension_numbers = #tpu.dot_dimension_numbers<[1], [0], [0], [1], [0, 0, 1, 1], [], []>} : vector<1x4xf32>, vector<4x32xf32>, vector<1x32xf32> -> vector<1x32xf32>
    %c0_12 = arith.constant 0 : index
    %c0_13 = arith.constant 0 : index
    %21 = vector.load %arg6[%c0_12, %c0_13] : memref<1x32xf32, #tpu.memory_space<vmem>>, vector<1x32xf32>
    %22 = arith.addf %20, %21 : vector<1x32xf32>
    %23 = arith.negf %22 : vector<1x32xf32>
    %24 = math.exp %23 : vector<1x32xf32>
    %cst_14 = arith.constant 1.000000e+00 : f32
    %25 = vector.broadcast %cst_14 : f32 to vector<1x32xf32>
    %26 = arith.addf %25, %24 : vector<1x32xf32>
    %27 = arith.divf %25, %26 : vector<1x32xf32>
    %c0_15 = arith.constant 0 : index
    %c0_16 = arith.constant 0 : index
    %c0_17 = arith.constant 0 : index
    %28 = vector.load %arg2[%c0_15, %c0_16, %c0_17] : memref<1x32x16xf32, #tpu.memory_space<vmem>>, vector<1x32x16xf32>
    %29 = vector.shape_cast %27 : vector<1x32xf32> to vector<1x32x1xf32>
    %30 = vector.broadcast %29 : vector<1x32x1xf32> to vector<1x32x16xf32>
    %31 = arith.mulf %28, %30 : vector<1x32x16xf32>
    %c0_18 = arith.constant 0 : index
    %c0_19 = arith.constant 0 : index
    %c0_20 = arith.constant 0 : index
    %32 = vector.load %arg7[%c0_18, %c0_19, %c0_20] : memref<1x32x16xf32, #tpu.memory_space<vmem>>, vector<1x32x16xf32>
    tpu.vector_store %arg7[%c0_18, %c0_19, %c0_20], %31 {strides = array<i32>} : memref<1x32x16xf32, #tpu.memory_space<vmem>>, vector<1x32x16xf32>,
    return
  }
  func.func @transform_0(%arg0: i32, %arg1: memref<2xi32, #tpu.memory_space<smem>>) -> (i32, i32, i32) {
    %c0_i32 = arith.constant 0 : i32
    %c0_i32_0 = arith.constant 0 : i32
    %c0_i32_1 = arith.constant 0 : i32
    return %arg0, %c0_i32, %c0_i32_0 : i32, i32, i32
  }
  func.func @transform_1(%arg0: i32, %arg1: memref<2xi32, #tpu.memory_space<smem>>) -> (i32, i32) {
    %c0_i32 = arith.constant 0 : i32
    %c0_i32_0 = arith.constant 0 : i32
    %c0_i32_1 = arith.constant 0 : i32
    return %c0_i32, %c0_i32_0 : i32, i32
  }
  func.func @transform_2(%arg0: i32, %arg1: memref<2xi32, #tpu.memory_space<smem>>) -> (i32, i32) {
    %c0_i32 = arith.constant 0 : i32
    %c0_i32_0 = arith.constant 0 : i32
    %c0_i32_1 = arith.constant 0 : i32
    return %c0_i32, %c0_i32_0 : i32, i32
  }
  func.func @transform_3(%arg0: i32, %arg1: memref<2xi32, #tpu.memory_space<smem>>) -> (i32, i32) {
    %c0_i32 = arith.constant 0 : i32
    %c0_i32_0 = arith.constant 0 : i32
    %c0_i32_1 = arith.constant 0 : i32
    return %c0_i32, %c0_i32_0 : i32, i32
  }
  func.func @transform_4(%arg0: i32, %arg1: memref<2xi32, #tpu.memory_space<smem>>) -> (i32, i32) {
    %c0_i32 = arith.constant 0 : i32
    %c0_i32_0 = arith.constant 0 : i32
    %c0_i32_1 = arith.constant 0 : i32
    return %c0_i32, %c0_i32_0 : i32, i32
  }
  func.func @transform_5(%arg0: i32, %arg1: memref<2xi32, #tpu.memory_space<smem>>) -> (i32, i32, i32) {
    %c0_i32 = arith.constant 0 : i32
    %c0_i32_0 = arith.constant 0 : i32
    %c0_i32_1 = arith.constant 0 : i32
    return %arg0, %c0_i32, %c0_i32_0 : i32, i32, i32
  }
}

</mosaic_0001>

<llo_original>
// kernel: tpu_custom_call.1
$region0: #{tpu_custom_call.1}
  #allocation0 [shape = 'u32[]', space=smem, size = 0x4, offset = 0x4, fixed_abs, tag = 'smem constant byte address 0x4 - core index']
  #allocation1 [shape = 'u32[72,128]{1,0:T(1,128)}', space=vmem, size = 0x9000, scoped, tag = 'internal scratch']
  #allocation2 [shape = 's32[1]{0}', space=sflag, size = 0x4, scoped, tag = 'scoped memory for tpu_custom_call.1']
  #allocation3 [shape = 'u8[512]{0}', space=smem, size = 0x200, scoped, tag = 'prefetched SMEM operand 0']
  %s0 = inlined_call_operand.vmem [shape: s32[2], index: 0, kind: input, shape index: {}]
  %s1 = inlined_call_operand.vmem [shape: f32[2,32,16], index: 1, kind: input, shape index: {}]
  %s2 = inlined_call_operand.vmem [shape: f32[32,4], index: 2, kind: input, shape index: {}]
  %s3 = inlined_call_operand.vmem [shape: f32[1,4], index: 3, kind: input, shape index: {}]
  %s4 = inlined_call_operand.vmem [shape: f32[4,32], index: 4, kind: input, shape index: {}]
  %s5 = inlined_call_operand.vmem [shape: f32[1,32], index: 5, kind: input, shape index: {}]
  %s6 = inlined_call_operand.vmem [shape: f32[2,32,16], index: 6, kind: output, shape index: {}]
  %s7 = sld [smem:[#allocation0]]
  $region53: #{tpu_custom_call.1} parent=0
    _
  %s9 = ssub.s32 1, %s7
  %s10 = scalar_select 0, %s9, %s7
  %s12 = sshll.u32 %s0, 4
  %s13 = int_to_ptr.vmem [resolvable:$true] %s12
  %15 = dma.vmem_to_smem %s13, 16, [#allocation3], [#allocation2]
  %17 = dma.done [#allocation2], 16
  %18 = sfence
  loop: start=0, step=1, limit=4
  $region2: #{tpu_custom_call.1} parent=0 // loop_pre_header
    _
  $region3: #{tpu_custom_call.1} parent=0 // loop_header
    %s20 = sphi 0, %s24
    %p21 = scmp.ge.s32.totalorder %s20, 4
    %s30 = sphi 0, %s32
    %s33 = sphi 0, %s30
    %s34 = sphi 0, %s33
    %s50 = sphi 0, %s34
    %s54 = sphi 0, %s54
    %s56 = sphi 0, %s54
    %s57 = sphi 0, %s56
    %s71 = sphi 0, %s57
    %s75 = sphi 0, %s75
    %s77 = sphi 0, %s75
    %s78 = sphi 0, %s77
    %s92 = sphi 0, %s78
    %s96 = sphi 0, %s96
    %s98 = sphi 0, %s96
    %s99 = sphi 0, %s98
    %s113 = sphi 0, %s99
    %s117 = sphi 0, %s117
    %s119 = sphi 0, %s117
    %s120 = sphi 0, %s119
    %s134 = sphi 0, %s120
    %s140 = sphi 0, %s142
    %s143 = sphi 0, %s140
    %s144 = sphi 0, %s143
    %s160 = sphi 0, %s144
  $region4: #{tpu_custom_call.1} parent=0 // loop_header_branch
    %23 = sbr.rel (%p21) target = $region8
  $region5: #{tpu_custom_call.1} parent=0 // loop_body
    %s25 = ssub.s32 %s20, 1
    %s26 = ssub.s32 %s20, 2
    %s27 = sadd.s32 %s20, 1
    %s28 = ssub.s32 %s20, %s27
    %p29 = scmp.eq.s32.totalorder %s28, 0
    %s31 = sadd.s32 %s30, 1
    %s32 = scalar_select %p29, %s30, %s31
    %p35 = pneg %p29
    %p36 = scmp.eq.s32.totalorder %s20, 1
    %p37 = por %p35, %p36
    %p38 = scmp.ne.s32.totalorder %s30, %s33
    %p39 = scmp.eq.s32.totalorder %s20, 0
    %p40 = por %p38, %p39
    %p41 = scmp.ne.s32.totalorder %s30, %s33
    %p42 = scmp.eq.s32.totalorder %s25, 1
    %p43 = por %p41, %p42
    %p44 = scmp.ne.s32.totalorder %s33, %s34
    %p45 = scmp.eq.s32.totalorder %s25, 0
    %p46 = por %p44, %p45
    %p47 = scmp.ne.s32.totalorder %s33, %s34
    %p48 = scmp.eq.s32.totalorder %s26, 1
    %p49 = por %p47, %p48
    %p51 = scmp.ne.s32.totalorder %s34, %s50
    %p52 = scmp.eq.s32.totalorder %s26, 0
    %p53 = por %p51, %p52
    %s55 = sadd.s32 %s54, 1
    %p58 = scmp.eq.s32.totalorder %s20, 1
    %p59 = scmp.ne.s32.totalorder %s54, %s56
    %p60 = scmp.eq.s32.totalorder %s20, 0
    %p61 = por %p59, %p60
    %p62 = scmp.ne.s32.totalorder %s54, %s56
    %p63 = scmp.eq.s32.totalorder %s25, 1
    %p64 = por %p62, %p63
    %p65 = scmp.ne.s32.totalorder %s56, %s57
    %p66 = scmp.eq.s32.totalorder %s25, 0
    %p67 = por %p65, %p66
    %p68 = scmp.ne.s32.totalorder %s56, %s57
    %p69 = scmp.eq.s32.totalorder %s26, 1
    %p70 = por %p68, %p69
    %p72 = scmp.ne.s32.totalorder %s57, %s71
    %p73 = scmp.eq.s32.totalorder %s26, 0
    %p74 = por %p72, %p73
    %s76 = sadd.s32 %s75, 1
    %p79 = scmp.eq.s32.totalorder %s20, 1
    %p80 = scmp.ne.s32.totalorder %s75, %s77
    %p81 = scmp.eq.s32.totalorder %s20, 0
    %p82 = por %p80, %p81
    %p83 = scmp.ne.s32.totalorder %s75, %s77
    %p84 = scmp.eq.s32.totalorder %s25, 1
    %p85 = por %p83, %p84
    %p86 = scmp.ne.s32.totalorder %s77, %s78
    %p87 = scmp.eq.s32.totalorder %s25, 0
    %p88 = por %p86, %p87
    %p89 = scmp.ne.s32.totalorder %s77, %s78
    %p90 = scmp.eq.s32.totalorder %s26, 1
    %p91 = por %p89, %p90
    %p93 = scmp.ne.s32.totalorder %s78, %s92
    %p94 = scmp.eq.s32.totalorder %s26, 0
    %p95 = por %p93, %p94
    %s97 = sadd.s32 %s96, 1
    %p100 = scmp.eq.s32.totalorder %s20, 1
    %p101 = scmp.ne.s32.totalorder %s96, %s98
    %p102 = scmp.eq.s32.totalorder %s20, 0
    %p103 = por %p101, %p102
    %p104 = scmp.ne.s32.totalorder %s96, %s98
    %p105 = scmp.eq.s32.totalorder %s25, 1
    %p106 = por %p104, %p105
    %p107 = scmp.ne.s32.totalorder %s98, %s99
    %p108 = scmp.eq.s32.totalorder %s25, 0
    %p109 = por %p107, %p108
    %p110 = scmp.ne.s32.totalorder %s98, %s99
    %p111 = scmp.eq.s32.totalorder %s26, 1
    %p112 = por %p110, %p111
    %p114 = scmp.ne.s32.totalorder %s99, %s113
    %p115 = scmp.eq.s32.totalorder %s26, 0
    %p116 = por %p114, %p115
    %s118 = sadd.s32 %s117, 1
    %p121 = scmp.eq.s32.totalorder %s20, 1
    %p122 = scmp.ne.s32.totalorder %s117, %s119
    %p123 = scmp.eq.s32.totalorder %s20, 0
    %p124 = por %p122, %p123
    %p125 = scmp.ne.s32.totalorder %s117, %s119
    %p126 = scmp.eq.s32.totalorder %s25, 1
    %p127 = por %p125, %p126
    %p128 = scmp.ne.s32.totalorder %s119, %s120
    %p129 = scmp.eq.s32.totalorder %s25, 0
    %p130 = por %p128, %p129
    %p131 = scmp.ne.s32.totalorder %s119, %s120
    %p132 = scmp.eq.s32.totalorder %s26, 1
    %p133 = por %p131, %p132
    %p135 = scmp.ne.s32.totalorder %s120, %s134
    %p136 = scmp.eq.s32.totalorder %s26, 0
    %p137 = por %p135, %p136
    %s138 = ssub.s32 %s20, %s27
    %p139 = scmp.eq.s32.totalorder %s138, 0
    %s141 = sadd.s32 %s140, 1
    %s142 = scalar_select %p139, %s140, %s141
    %p145 = pneg %p139
    %p146 = scmp.eq.s32.totalorder %s20, 1
    %p147 = por %p145, %p146
    %p148 = scmp.ne.s32.totalorder %s140, %s143
    %p149 = scmp.eq.s32.totalorder %s20, 0
    %p150 = por %p148, %p149
    %p151 = scmp.ne.s32.totalorder %s140, %s143
    %p152 = scmp.eq.s32.totalorder %s25, 1
    %p153 = por %p151, %p152
    %p154 = scmp.ne.s32.totalorder %s143, %s144
    %p155 = scmp.eq.s32.totalorder %s25, 0
    %p156 = por %p154, %p155
    %p157 = scmp.ne.s32.totalorder %s143, %s144
    %p158 = scmp.eq.s32.totalorder %s26, 1
    %p159 = por %p157, %p158
    %p161 = scmp.ne.s32.totalorder %s144, %s160
    %p162 = scmp.eq.s32.totalorder %s26, 0
    %p163 = por %p161, %p162
    %p164 = scmp.le.s32.totalorder 1, %s20
    %p165 = scmp.lt.s32.totalorder %s20, 3
    %p166 = pnand %p164, %p165
    %p167 = pneg %p166
    // Predicated region
    $region9: #{tpu_custom_call.1} parent=5 // pred_check
      _
    $region10: #{tpu_custom_call.1} parent=5 // pred_check_branch
      %169 = sbr.rel (%p166) target = $region12
    $region11: #{tpu_custom_call.1} parent=5 // pred_region
      %s170 = ssub.s32 %s20, 1
      // Predicated region
      $region13: #{tpu_custom_call.1} parent=11 // pred_check
        %p171 = pneg %p67
      $region14: #{tpu_custom_call.1} parent=11 // pred_check_branch
        %173 = sbr.rel (%p171) target = $region16
      $region15: #{tpu_custom_call.1} parent=11 // pred_region
        _
      $region16: #{tpu_custom_call.1} parent=11 // pred_fallthru
        _
      // Predicated region
      $region17: #{tpu_custom_call.1} parent=11 // pred_check
        %p174 = pneg %p88
      $region18: #{tpu_custom_call.1} parent=11 // pred_check_branch
        %176 = sbr.rel (%p174) target = $region20
      $region19: #{tpu_custom_call.1} parent=11 // pred_region
        _
      $region20: #{tpu_custom_call.1} parent=11 // pred_fallthru
        _
      // Predicated region
      $region21: #{tpu_custom_call.1} parent=11 // pred_check
        %p177 = pneg %p109
      $region22: #{tpu_custom_call.1} parent=11 // pred_check_branch
        %179 = sbr.rel (%p177) target = $region24
      $region23: #{tpu_custom_call.1} parent=11 // pred_region
        _
      $region24: #{tpu_custom_call.1} parent=11 // pred_fallthru
        _
      // Predicated region
      $region25: #{tpu_custom_call.1} parent=11 // pred_check
        %p180 = pneg %p130
      $region26: #{tpu_custom_call.1} parent=11 // pred_check_branch
        %182 = sbr.rel (%p180) target = $region28
      $region27: #{tpu_custom_call.1} parent=11 // pred_region
        _
      $region28: #{tpu_custom_call.1} parent=11 // pred_fallthru
        _
    $region12: #{tpu_custom_call.1} parent=5 // pred_fallthru
      _
    %p183 = scmp.lt.s32.totalorder %s20, 2
    // Predicated region
    $region29: #{tpu_custom_call.1} parent=5 // pred_check
      %p184 = pneg %p183
    $region30: #{tpu_custom_call.1} parent=5 // pred_check_branch
      %186 = sbr.rel (%p184) target = $region32
    $region31: #{tpu_custom_call.1} parent=5 // pred_region
      // Predicated region
      $region33: #{tpu_custom_call.1} parent=31 // pred_check
        %p187 = pneg %p40
      $region34: #{tpu_custom_call.1} parent=31 // pred_check_branch
        %189 = sbr.rel (%p187) target = $region36
      $region35: #{tpu_custom_call.1} parent=31 // pred_region
        %p190 = scmp.lt.s32.totalorder %s20, 1
        %s191 = scalar_select %p190, %s20, 1
        %s192 = smul.addr %s191, 4
        %s193 = smul.addr %s192, 8
        %s194 = scalar_lea.vmem %s1, %s193
      $region36: #{tpu_custom_call.1} parent=31 // pred_fallthru
        _
    $region32: #{tpu_custom_call.1} parent=5 // pred_fallthru
      _
    %p195 = scmp.le.s32.totalorder 1, %s20
    %p196 = scmp.lt.s32.totalorder %s20, 3
    %p197 = pnand %p195, %p196
    %p198 = pneg %p197
    // Predicated region
    $region37: #{tpu_custom_call.1} parent=5 // pred_check
      _
    $region38: #{tpu_custom_call.1} parent=5 // pred_check_branch
      %200 = sbr.rel (%p197) target = $region40
    $region39: #{tpu_custom_call.1} parent=5 // pred_region
      %s201 = ssub.s32 %s20, 1
      %p202 = scmp.lt.s32.totalorder %s25, 1
      %s203 = scalar_select %p202, %s25, 1
      %s204 = smul.addr %s203, 4
      %s205 = smul.addr %s204, 8
      %s206 = scalar_lea.vmem %s1, %s205
      %p207 = pneg %p46
      %p208 = pneg %p43
      %p209 = pneg %p67
      %p210 = pneg %p64
      %p211 = pneg %p88
      %p212 = pneg %p85
      %p213 = pneg %p109
      %p214 = pneg %p106
      %p215 = pneg %p130
      %p216 = pneg %p127
      %p217 = pneg %p156
      %p218 = pneg %p153
      %p219 = scmp.lt.s32.totalorder %s25, 1
      %s220 = scalar_select %p219, %s25, 1
      %s221 = smul.addr %s220, 4
      %s222 = smul.addr %s221, 8
      %s223 = scalar_lea.vmem %s6, %s222
      %p224 = scmp.lt.s32.totalorder %s25, 1
      %s225 = scalar_select %p224, %s25, 1
      %s226 = smul.addr %s225, 4
      %s227 = smul.addr %s226, 8
      %s228 = scalar_lea.vmem %s1, %s227
      %p229 = scmp.lt.s32.totalorder %s25, 1
      %s230 = scalar_select %p229, %s25, 1
      %s231 = smul.addr %s230, 4
      %s232 = smul.addr %s231, 8
      %s233 = scalar_lea.vmem %s6, %s232
      %v234 = vld [vmem:[%s228] sm:$0xff]
      %v235 = vld [vmem:[%s228 + $0x8] sm:$0xff]
      %v236 = vld [vmem:[%s228 + $0x10] sm:$0xff]
      %v237 = vld [vmem:[%s228 + $0x18] sm:$0xff]
      %vm238 = vcmask 130048
      %v239 = vsel %vm238, %v234, 0.0
      %240 = vadd.xlane.f32.xlu0 %v239
      %v241 = vpop.xlane.xlu0 %240
      %v242 = vsel %vm238, %v235, 0.0
      %243 = vadd.xlane.f32.xlu0 %v242
      %v244 = vpop.xlane.xlu0 %243
      %v245 = vsel %vm238, %v236, 0.0
      %246 = vadd.xlane.f32.xlu0 %v245
      %v247 = vpop.xlane.xlu0 %246
      %v248 = vsel %vm238, %v237, 0.0
      %249 = vadd.xlane.f32.xlu0 %v248
      %v250 = vpop.xlane.xlu0 %249
      %s251 = sld [smem:[#allocation3 + %s25]]
      %s252 = scvt.s32.f32 %s251
      %v253 = vstv %s252
      %v254 = vrcp.pop %v253
      %v255 = vmul.f32 %v253, %v254
      %v256 = vsub.f32 1.0, %v255
      %v257 = vmul.f32 %v254, %v256
      %v258 = vadd.f32 %v254, %v257
      %vm259 = vweird.f32 %v253
      %vm260 = vweird.f32 %v254
      %vm261 = vmor %vm259, %vm260
      %v262 = vsel %vm261, %v254, %v258
      %v263 = vand.u32 2147483647, %v253
      %vm264 = vcmp.eq.f32.partialorder %v263, 8.507059e+37
      %v265 = vand.u32 %v253, 2147483648
      %v266 = vor.u32 1.1754944e-38, %v265
      %v267 = vsel %vm264, %v266, %v262
      %s268 = vtos %v267
      %v269 = vstv %s268
      %v270 = vmul.f32 %v241, %v269
      %v271 = vmul.f32 %v244, %v269
      %v272 = vmul.f32 %v247, %v269
      %v273 = vmul.f32 %v250, %v269
      %v274 = vld [vmem:[%s2] sm:$0xff]
      %v275 = vld [vmem:[%s2 + $0x8] sm:$0xff]
      %v276 = vld [vmem:[%s2 + $0x10] sm:$0xff]
      %v277 = vld [vmem:[%s2 + $0x18] sm:$0xff]
      %v278 = vld [vmem:[%s3] sm:$0x1]
      %v283 = vlaneseq
      %v284 = vand.u32 %v283, 127
      %v285 = vperm.slane %v270, %v284
      %v286 = vadd.s32 %v284, 4294967288
      %v287 = vperm.slane %v271, %v286
      %vm288 = vcmask 130112
      %v289 = vsel %vm288, %v287, %v285
      %v290 = vadd.s32 %v284, 4294967280
      %v291 = vperm.slane %v272, %v290
      %vm292 = vcmask 195712
      %v293 = vsel %vm292, %v291, %v289
      %v294 = vadd.s32 %v284, 4294967272
      %v295 = vperm.slane %v273, %v294
      %vm296 = vcmask 261312
      %v297 = vsel %vm296, %v295, %v293
      %vm298 = vcmask 261120
      %v299 = vsel %vm298, %v297, 0
      %301 = vmatpush.msra.mxu0 0.0
      %302 = vmatpush.msra.mxu0 0.0
      %303 = vmatpush.msra.mxu0 0.0
      %304 = vmatpush.msra.mxu0 0.0
      %305 = vmatpush.msra.mxu0 0.0
      %306 = vmatpush.msra.mxu0 0.0
      %307 = vmatpush.msra.mxu0 0.0
      %308 = vmatpush.msra.mxu0 0.0
      %309 = vmatpush.msra.mxu0 0.0
      %310 = vmatpush.msra.mxu0 0.0
      %311 = vmatpush.msra.mxu0 0.0
      %312 = vmatpush.msra.mxu0 0.0
      %313 = vmatpush.msra.mxu0 %v277
      %314 = vmatpush.msra.mxu0 %v276
      %315 = vmatpush.msra.mxu0 %v275
      %316 = vmatpush.msra.mxu0 %v274
      %317 = vmatmul.f32.gmra.mxu0 %v299
      %v318 = vpop.f32.mrf.mxu0
      %v319 = vadd.f32 %v278, %v318
      %320 = vdwg.mxu0
      %v321 = vxor.u32 %v319, 2147483648
      %v322 = vmul.f32 %v321, 1.442695
      %v323 = vpow.pop %v322
      %v324 = vadd.f32 %v323, 1.0
      %v325 = vrcp.pop %v324
      %v326 = vmul.f32 %v324, %v325
      %v327 = vsub.f32 1.0, %v326
      %v328 = vmul.f32 %v325, %v327
      %v329 = vadd.f32 %v325, %v328
      %vm330 = vweird.f32 %v324
      %vm331 = vweird.f32 %v325
      %vm332 = vmor %vm330, %vm331
      %v333 = vsel %vm332, %v325, %v329
      %v334 = vand.u32 2147483647, %v324
      %vm335 = vcmp.eq.f32.partialorder %v334, 8.507059e+37
      %v336 = vand.u32 %v324, 2147483648
      %v337 = vor.u32 1.1754944e-38, %v336
      %v338 = vsel %vm335, %v337, %v333
      %v339 = vmul.f32 1.0, %v338
      %v340 = vmul.f32 %v319, %v339
      %v341 = vld [vmem:[%s4] sm:$0xf]
      %v342 = vld [vmem:[%s5] sm:$0x1]
      %vm343 = vcmask 31744
      %v345 = vsel %vm343, %v340, 0
      %vm347 = vcmask 1043456
      %v349 = vsel %vm347, %v341, 0
      %351 = vmatpush.msra.mxu0 0.0
      %352 = vmatpush.msra.mxu0 0.0
      %353 = vmatpush.msra.mxu0 0.0
      %354 = vmatpush.msra.mxu0 0.0
      %355 = vmatpush.msra.mxu0 0.0
      %356 = vmatpush.msra.mxu0 0.0
      %357 = vmatpush.msra.mxu0 0.0
      %358 = vmatpush.msra.mxu0 0.0
      %359 = vmatpush.msra.mxu0 0.0
      %360 = vmatpush.msra.mxu0 0.0
      %361 = vmatpush.msra.mxu0 0.0
      %362 = vmatpush.msra.mxu0 0.0
      %363 = vmatpush.msra.mxu0 0.0
      %364 = vmatpush.msra.mxu0 0.0
      %365 = vmatpush.msra.mxu0 0.0
      %366 = vmatpush.msra.mxu0 %v349
      %367 = vmatmul.f32.gmra.mxu0 %v345
      %v368 = vpop.f32.mrf.mxu0
      %v369 = vadd.f32 %v342, %v368
      %370 = vdwg.mxu0
      %v371 = vxor.u32 %v369, 2147483648
      %v372 = vmul.f32 %v371, 1.442695
      %v373 = vpow.pop %v372
      %v374 = vadd.f32 %v373, 1.0
      %v375 = vrcp.pop %v374
      %v376 = vmul.f32 %v374, %v375
      %v377 = vsub.f32 1.0, %v376
      %v378 = vmul.f32 %v375, %v377
      %v379 = vadd.f32 %v375, %v378
      %vm380 = vweird.f32 %v374
      %vm381 = vweird.f32 %v375
      %vm382 = vmor %vm380, %vm381
      %v383 = vsel %vm382, %v375, %v379
      %v384 = vand.u32 2147483647, %v374
      %vm385 = vcmp.eq.f32.partialorder %v384, 8.507059e+37
      %v386 = vand.u32 %v374, 2147483648
      %v387 = vor.u32 1.1754944e-38, %v386
      %v388 = vsel %vm385, %v387, %v383
      %v389 = vmul.f32 1.0, %v388
      %v390 = vperm.slane %v389, 0
      %v391 = vlaneseq
      %v392 = vshrl.u32 %v391, 7
      %394 = vset.pattern.permute.xlu0 %v392
      %395 = vperm.xlu0 %394, %v390
      %v396 = vpop.permute.xlu0 %395
      %v397 = vlaneseq
      %v398 = vshrl.u32 %v397, 7
      %v399 = vadd.s32 %v398, 8
      %400 = vset.pattern.permute.xlu0 %v399
      %401 = vperm.xlu0 %400, %v390
      %v402 = vpop.permute.xlu0 %401
      %v403 = vlaneseq
      %v404 = vshrl.u32 %v403, 7
      %v405 = vadd.s32 %v404, 16
      %406 = vset.pattern.permute.xlu0 %v405
      %407 = vperm.xlu0 %406, %v390
      %v408 = vpop.permute.xlu0 %407
      %v409 = vlaneseq
      %v410 = vshrl.u32 %v409, 7
      %v411 = vadd.s32 %v410, 24
      %412 = vset.pattern.permute.xlu0 %v411
      %413 = vperm.xlu0 %412, %v390
      %v414 = vpop.permute.xlu0 %413
      %v415 = vmul.f32 %v234, %v396
      %v416 = vmul.f32 %v235, %v402
      %v417 = vmul.f32 %v236, %v408
      %v418 = vmul.f32 %v237, %v414
      %419 = vst.msk [vmem:[%s233] sm:$0xff] %vm238, %v415
      %420 = vst.msk [vmem:[%s233 + $0x8] sm:$0xff] %vm238, %v416
      %421 = vst.msk [vmem:[%s233 + $0x10] sm:$0xff] %vm238, %v417
      %422 = vst.msk [vmem:[%s233 + $0x18] sm:$0xff] %vm238, %v418
      %p423 = scmp.lt.s32.totalorder %s25, 1
      %s424 = scalar_select %p423, %s25, 1
      %s425 = smul.addr %s424, 4
      %s426 = smul.addr %s425, 8
      %s427 = scalar_lea.vmem %s6, %s426
      // Predicated region
      $region41: #{tpu_custom_call.1} parent=39 // pred_check
        %p428 = pneg %p153
      $region42: #{tpu_custom_call.1} parent=39 // pred_check_branch
        %430 = sbr.rel (%p428) target = $region44
      $region43: #{tpu_custom_call.1} parent=39 // pred_region
        _
      $region44: #{tpu_custom_call.1} parent=39 // pred_fallthru
        _
    $region40: #{tpu_custom_call.1} parent=5 // pred_fallthru
      _
    %p431 = scmp.le.s32.totalorder 2, %s20
    // Predicated region
    $region45: #{tpu_custom_call.1} parent=5 // pred_check
      %p432 = pneg %p431
    $region46: #{tpu_custom_call.1} parent=5 // pred_check_branch
      %434 = sbr.rel (%p432) target = $region48
    $region47: #{tpu_custom_call.1} parent=5 // pred_region
      %s435 = ssub.s32 %s20, 2
      // Predicated region
      $region49: #{tpu_custom_call.1} parent=47 // pred_check
        %p436 = pneg %p159
      $region50: #{tpu_custom_call.1} parent=47 // pred_check_branch
        %438 = sbr.rel (%p436) target = $region52
      $region51: #{tpu_custom_call.1} parent=47 // pred_region
        %p439 = scmp.lt.s32.totalorder %s26, 1
        %s440 = scalar_select %p439, %s26, 1
        %s441 = smul.addr %s440, 4
        %s442 = smul.addr %s441, 8
        %s443 = scalar_lea.vmem %s6, %s442
      $region52: #{tpu_custom_call.1} parent=47 // pred_fallthru
        _
    $region48: #{tpu_custom_call.1} parent=5 // pred_fallthru
      _
  $region6: #{tpu_custom_call.1} parent=0 // loop_footer
    %s24 = sadd.s32 1, %s20
  $region7: #{tpu_custom_call.1} parent=0 // loop_footer_branch
    %19 = sbr.rel target = $region3
  $region8: #{tpu_custom_call.1} parent=0 // loop_exit
    _

</llo_original>
